<compile_context>
chip_gen: v7x
topology: tpu7x:2x2x1
jax: 0.10.0
libtpu: 0.0.40
codegen_flags: <defaults>
</compile_context>

<pallas_src>
import functools

import jax
import jax.numpy as jnp
from jax.experimental import pallas as pl
from jax.experimental.pallas import tpu as pltpu


def _round_up(x, m):
    return (x + m - 1) // m * m


def _vmem_capacity_bytes():
    try:
        return int(pltpu.get_tpu_info().vmem_capacity_bytes)
    except Exception:
        return 128 << 20  # v5e / v6e physical VMEM; conservative default


def _kv_proj_kernel(x_ref, wk_ref, bk_ref, wv_ref, bv_ref, k_ref, v_ref, *, mxu_dtype):
    # x_ref          : (tm, E) activation tile (streamed along M)
    # wk_ref/wv_ref  : (E, tn) pre-transposed weights (contract rhs dim 0 -> no
    #                  in-kernel transpose; resident when tn == E)
    # bk_ref/bv_ref  : (1, tn) f32 biases
    x = x_ref[...].astype(mxu_dtype)                      # per-tile cast, VPU-cheap
    k = jnp.dot(x, wk_ref[...], preferred_element_type=jnp.float32)
    v = jnp.dot(x, wv_ref[...], preferred_element_type=jnp.float32)
    k_ref[...] = (k + bk_ref[...]).astype(k_ref.dtype)    # f32 bias add, then downcast
    v_ref[...] = (v + bv_ref[...]).astype(v_ref.dtype)


def kv_projection(x_flat, wk, bk, wv, bv, *, mxu_dtype=None, out_dtype=None, tm=None):
    """K/V projections y = x @ W.T + b as one tiled Pallas kernel.

    x_flat: (M, E); wk/wv: (E, E) torch nn.Linear weights (out, in); bk/bv: (E,).
    Returns (k_flat, v_flat), each (M, E) in `out_dtype` (default x dtype).
    """
    M, E = x_flat.shape
    x_dtype = jnp.dtype(x_flat.dtype)
    mxu_dtype = jnp.dtype(mxu_dtype) if mxu_dtype is not None else x_dtype
    out_dtype = jnp.dtype(out_dtype) if out_dtype is not None else x_dtype
    x_item, w_item, o_item = x_dtype.itemsize, mxu_dtype.itemsize, out_dtype.itemsize

    vmem_cap = _vmem_capacity_bytes()
    budget = (vmem_cap * 25) // 32          # ~78%: leave Mosaic internal scratch etc.
    headroom = 4 << 20

    # ---------- choose tn (output-dim tile; tn == E keeps both weights resident) ----
    tm_probe = 256

    def _fits(tn_c, wfac):
        wbytes = 2 * E * tn_c * w_item * wfac + 2 * tn_c * 4 * wfac
        tiles = tm_probe * E * x_item * 2 + 2 * tm_probe * tn_c * o_item * 2
        return wbytes + tiles + headroom <= budget

    tn = E
    if not _fits(E, 1) and E % 128 == 0:
        q = E // 128
        for d in range(q - 1, 0, -1):       # largest lane-aligned divisor that fits
            if q % d == 0 and _fits(128 * d, 2):
                tn = 128 * d
                break
        else:
            tn = 128
    n_steps = E // tn
    single_buffer_weights = tn == E          # resident -> single pipeline buffer
    weight_buf = 1 if single_buffer_weights else 2

    # ---------- choose tm (M tile): MXU-aligned, sublane-packing aware -------------
    min_align = 8 * max(1, 4 // min(x_item, o_item))      # f32: 8, bf16: 16, int8: 32
    prefer = 256 if vmem_cap <= (64 << 20) else 512        # v7x vs v5e/v6e default
    if tm is None:
        w_resident = 2 * E * tn * w_item * weight_buf + 2 * tn * 4 * weight_buf
        per_row = E * x_item * 2 + 2 * tn * o_item * 2     # x + 2 outputs, double-buf
        max_rows = max(min_align, (budget - w_resident - headroom) // max(per_row, 1))
        tm = min(prefer, int(max_rows))
        for a in (256, 128, min_align):
            if tm >= a:
                tm = (tm // a) * a
                break
        tm = max(min_align, tm)
    else:
        tm = max(min_align, _round_up(int(tm), min_align))
    tm = min(tm, _round_up(M, min_align))
    # Guarantee >= 2 grid steps over M so the "parallel" axis actually splits
    # across v7x's two TensorCores (shrink tm, keeping alignment).
    if M > min_align and _round_up(M, tm) // tm < 2:
        half = max(min_align, (M + 1) // 2)
        for a in (256, 128):
            if half >= a:
                half = _round_up(half, a)
                break
        half = _round_up(half, min_align)
        tm = min(tm, half)
    M_pad = _round_up(M, tm)
    m_steps = M_pad // tm

    # ---------- wrapper-side, one-time prep -----------------------------------------
    x_p = x_flat if M_pad == M else jnp.pad(x_flat, ((0, M_pad - M), (0, 0)))
    wk_t = wk.T.astype(mxu_dtype)            # one-time (E,E) transpose, O(E^2) << O(M E^2)
    wv_t = wv.T.astype(mxu_dtype)
    bk2 = bk.reshape(1, E).astype(jnp.float32)
    bv2 = bv.reshape(1, E).astype(jnp.float32)

    cost = pl.CostEstimate(
        flops=2 * 2 * M_pad * E * E,                     # two (M,E)x(E,E) matmuls
        transcendentals=0,
        bytes_accessed=(M_pad * E * x_item               # x
                        + 2 * E * E * w_item             # wk, wv
                        + 2 * E * 4                      # biases
                        + 2 * M_pad * E * o_item),       # k, v outputs
    )

    kernel = functools.partial(_kv_proj_kernel, mxu_dtype=mxu_dtype)
    grid = (m_steps, n_steps)

    def _run(single_buf):
        wkw = dict(pipeline_mode=pl.Buffered(1)) if single_buf else {}
        wfac = 1 if single_buf else 2
        vmem_needed = (2 * E * tn * w_item * wfac        # weight blocks
                       + 2 * tn * 4 * wfac               # bias blocks
                       + tm * E * x_item * 2             # streamed x (double-buffered)
                       + 2 * tm * tn * o_item * 2        # k/v tiles (double-buffered)
                       + headroom)
        vmem_limit = int(min(budget, max(16 << 20, _round_up(vmem_needed, 1 << 20))))
        return pl.pallas_call(
            kernel,
            out_shape=(
                jax.ShapeDtypeStruct((M_pad, E), out_dtype),
                jax.ShapeDtypeStruct((M_pad, E), out_dtype),
            ),
            grid_spec=pltpu.PrefetchScalarGridSpec(
                num_scalar_prefetch=0,
                grid=grid,
                in_specs=[
                    pl.BlockSpec((tm, E), lambda i, j: (i, 0)),        # x: resident across j
                    pl.BlockSpec((E, tn), lambda i, j: (0, j), **wkw),  # wk (transposed)
                    pl.BlockSpec((1, tn), lambda i, j: (0, j), **wkw),  # bk
                    pl.BlockSpec((E, tn), lambda i, j: (0, j), **wkw),  # wv (transposed)
                    pl.BlockSpec((1, tn), lambda i, j: (0, j), **wkw),  # bv
                ],
                out_specs=(
                    pl.BlockSpec((tm, tn), lambda i, j: (i, j)),
                    pl.BlockSpec((tm, tn), lambda i, j: (i, j)),
                ),
            ),
            compiler_params=pltpu.CompilerParams(
                dimension_semantics=("parallel", "arbitrary"),  # M split across TCs
                vmem_limit_bytes=vmem_limit,
            ),
            cost_estimate=cost,
        )(x_p, wk_t, bk2, wv_t, bv2)

    if single_buffer_weights:
        try:
            k_p, v_p = _run(True)
        except Exception:
            # pl.Buffered(1) unsupported on this jax/libtpu: fall back to the
            # default double-buffered resident weights (correct, more VMEM).
            k_p, v_p = _run(False)
    else:
        k_p, v_p = _run(False)

    if M_pad != M:
        k_p, v_p = k_p[:M], v_p[:M]
    return k_p, v_p


def attention_projection_forward(query, wk, bk, wv, bv, num_heads, head_dim, *,
                                 mxu_dtype=None, out_dtype=None, tm=None,
                                 transpose_output=True):
    """AttentionProjection.forward with layer_state=None,
    encoder_decoder_attention=False, use_past=False.

    query: (seq_len, bsz, embed_dim)
    wk/wv: (embed_dim, embed_dim) torch nn.Linear weights (out, in); bk/bv: (embed_dim,)
    Returns k, v with shape (bsz*num_heads, seq_len, head_dim) when
    transpose_output=True (module semantics); with transpose_output=False the
    free-reshape layout (seq_len, bsz*num_heads, head_dim) is returned so a
    downstream attention kernel can absorb the (1,0,2) permutation in its
    BlockSpec index_map and skip a full HBM round-trip over k and v.
    """
    seq_len, bsz, embed_dim = query.shape
    x_flat = query.reshape(seq_len * bsz, embed_dim)
    k_flat, v_flat = kv_projection(x_flat, wk, bk, wv, bv,
                                   mxu_dtype=mxu_dtype, out_dtype=out_dtype, tm=tm)
    k = k_flat.reshape(seq_len, bsz * num_heads, head_dim)
    v = v_flat.reshape(seq_len, bsz * num_heads, head_dim)
    if transpose_output:
        # shape_proj: .view(-1, bsz*num_heads, head_dim).transpose(0, 1).
        # Kept in XLA: the fused output's last dim would be head_dim (< 128)
        # -> masked partial stores; lane-dense (M, E) kernel output wins.
        k = jnp.transpose(k, (1, 0, 2))
        v = jnp.transpose(v, (1, 0, 2))
    return k, v


if __name__ == "__main__":
    num_heads = 4
    head_dim = 8
    embed_dim = num_heads * head_dim  # 32
    seq_len = 8
    bsz = 2

    key = jax.random.PRNGKey(0)
    kq, kwk, kbk, kwv, kbv = jax.random.split(key, 5)
    query = jax.random.normal(kq, (seq_len, bsz, embed_dim), dtype=jnp.float32)
    wk = jax.random.normal(kwk, (embed_dim, embed_dim), dtype=jnp.float32) * 0.1
    bk = jax.random.normal(kbk, (embed_dim,), dtype=jnp.float32) * 0.1
    wv = jax.random.normal(kwv, (embed_dim, embed_dim), dtype=jnp.float32) * 0.1
    bv = jax.random.normal(kbv, (embed_dim,), dtype=jnp.float32) * 0.1

    # f32 path (auto tile selection picks tm=8 here -> 2-step "parallel" grid).
    k_out, v_out = attention_projection_forward(query, wk, bk, wv, bv,
                                                num_heads, head_dim)
    jax.block_until_ready((k_out, v_out))

    # Reference (plain JAX, mirroring torch semantics).
    def ref(q, w, b):
        y = q.reshape(seq_len * bsz, embed_dim) @ w.T + b
        y = y.reshape(seq_len, bsz * num_heads, head_dim)
        return jnp.transpose(y, (1, 0, 2))

    k_ref = ref(query, wk, bk)
    v_ref = ref(query, wv, bv)
    assert k_out.shape == (bsz * num_heads, seq_len, head_dim)
    assert v_out.shape == (bsz * num_heads, seq_len, head_dim)
    assert jnp.allclose(k_out, k_ref, atol=1e-5, rtol=1e-5)
    assert jnp.allclose(v_out, v_ref, atol=1e-5, rtol=1e-5)

    # bf16-MXU / bf16-output fast path (production config on v5e/v6e/v7x):
    # bf16 MXU issue rate, halved weight VMEM + weight DMA, halved k/v writeback.
    k_bf, v_bf = attention_projection_forward(
        query, wk, bk, wv, bv, num_heads, head_dim,
        mxu_dtype=jnp.bfloat16, out_dtype=jnp.bfloat16)
    jax.block_until_ready((k_bf, v_bf))
    assert jnp.allclose(k_bf.astype(jnp.float32), k_ref, atol=5e-2, rtol=5e-2)
    assert jnp.allclose(v_bf.astype(jnp.float32), v_ref, atol=5e-2, rtol=5e-2)

    # TODO(synk): the layer_state/use_past cache-concat branches are pure
    # reshape/concat of cached tensors (no projection compute) and are not
    # implemented as a kernel.
    print("KERNEL_OK")
</pallas_src>

<mosaic_0001>
module attributes {stable_mosaic.version = 11 : i64} {
  func.func @_kv_proj_kernel(%arg0: i32, %arg1: i32, %arg2: memref<8x32xf32, #tpu.memory_space<vmem>>, %arg3: memref<32x32xf32, #tpu.memory_space<vmem>>, %arg4: memref<1x32xf32, #tpu.memory_space<vmem>>, %arg5: memref<32x32xf32, #tpu.memory_space<vmem>>, %arg6: memref<1x32xf32, #tpu.memory_space<vmem>>, %arg7: memref<8x32xf32, #tpu.memory_space<vmem>>, %arg8: memref<8x32xf32, #tpu.memory_space<vmem>>) attributes {dimension_semantics = [#tpu.dimension_semantics<parallel>, #tpu.dimension_semantics<arbitrary>], iteration_bounds = array<i64: 2, 1>, scalar_prefetch = 0 : i64, scratch_operands = 0 : i64, tpu.core_type = #tpu.core_type<tc>, window_params = [{transform_indices = @transform_0, window_bounds = array<i64: 8, 32>}, {pipeline_mode = #tpu.pipeline_mode<synchronous>, transform_indices = @transform_1, window_bounds = array<i64: 32, 32>}, {pipeline_mode = #tpu.pipeline_mode<synchronous>, transform_indices = @transform_2, window_bounds = array<i64: 1, 32>}, {pipeline_mode = #tpu.pipeline_mode<synchronous>, transform_indices = @transform_3, window_bounds = array<i64: 32, 32>}, {pipeline_mode = #tpu.pipeline_mode<synchronous>, transform_indices = @transform_4, window_bounds = array<i64: 1, 32>}, {transform_indices = @transform_5, window_bounds = array<i64: 8, 32>}, {transform_indices = @transform_6, window_bounds = array<i64: 8, 32>}]} {
    %c0 = arith.constant 0 : index
    %c0_0 = arith.constant 0 : index
    %0 = vector.load %arg2[%c0, %c0_0] : memref<8x32xf32, #tpu.memory_space<vmem>>, vector<8x32xf32>
    %c0_1 = arith.constant 0 : index
    %c0_2 = arith.constant 0 : index
    %1 = vector.load %arg3[%c0_1, %c0_2] : memref<32x32xf32, #tpu.memory_space<vmem>>, vector<32x32xf32>
    %cst = arith.constant dense<0.000000e+00> : vector<8x32xf32>
    %2 = tpu.matmul %0, %1, %cst {dimension_numbers = #tpu.dot_dimension_numbers<[1], [0], [0], [1], [0, 0, 1, 1], [], []>} : vector<8x32xf32>, vector<32x32xf32>, vector<8x32xf32> -> vector<8x32xf32>
    %c0_3 = arith.constant 0 : index
    %c0_4 = arith.constant 0 : index
    %3 = vector.load %arg5[%c0_3, %c0_4] : memref<32x32xf32, #tpu.memory_space<vmem>>, vector<32x32xf32>
    %cst_5 = arith.constant dense<0.000000e+00> : vector<8x32xf32>
    %4 = tpu.matmul %0, %3, %cst_5 {dimension_numbers = #tpu.dot_dimension_numbers<[1], [0], [0], [1], [0, 0, 1, 1], [], []>} : vector<8x32xf32>, vector<32x32xf32>, vector<8x32xf32> -> vector<8x32xf32>
    %c0_6 = arith.constant 0 : index
    %c0_7 = arith.constant 0 : index
    %5 = vector.load %arg4[%c0_6, %c0_7] : memref<1x32xf32, #tpu.memory_space<vmem>>, vector<1x32xf32>
    %6 = vector.broadcast %5 : vector<1x32xf32> to vector<8x32xf32>
    %7 = arith.addf %2, %6 : vector<8x32xf32>
    %c0_8 = arith.constant 0 : index
    %c0_9 = arith.constant 0 : index
    %8 = vector.load %arg7[%c0_8, %c0_9] : memref<8x32xf32, #tpu.memory_space<vmem>>, vector<8x32xf32>
    tpu.vector_store %arg7[%c0_8, %c0_9], %7 {strides = array<i32>} : memref<8x32xf32, #tpu.memory_space<vmem>>, vector<8x32xf32>,
    %c0_10 = arith.constant 0 : index
    %c0_11 = arith.constant 0 : index
    %9 = vector.load %arg6[%c0_10, %c0_11] : memref<1x32xf32, #tpu.memory_space<vmem>>, vector<1x32xf32>
    %10 = vector.broadcast %9 : vector<1x32xf32> to vector<8x32xf32>
    %11 = arith.addf %4, %10 : vector<8x32xf32>
    %c0_12 = arith.constant 0 : index
    %c0_13 = arith.constant 0 : index
    %12 = vector.load %arg8[%c0_12, %c0_13] : memref<8x32xf32, #tpu.memory_space<vmem>>, vector<8x32xf32>
    tpu.vector_store %arg8[%c0_12, %c0_13], %11 {strides = array<i32>} : memref<8x32xf32, #tpu.memory_space<vmem>>, vector<8x32xf32>,
    return
  }
  func.func @transform_0(%arg0: i32, %arg1: i32) -> (i32, i32) {
    %c0_i32 = arith.constant 0 : i32
    %c0_i32_0 = arith.constant 0 : i32
    return %arg0, %c0_i32 : i32, i32
  }
  func.func @transform_1(%arg0: i32, %arg1: i32) -> (i32, i32) {
    %c0_i32 = arith.constant 0 : i32
    %c0_i32_0 = arith.constant 0 : i32
    return %c0_i32, %arg1 : i32, i32
  }
  func.func @transform_2(%arg0: i32, %arg1: i32) -> (i32, i32) {
    %c0_i32 = arith.constant 0 : i32
    %c0_i32_0 = arith.constant 0 : i32
    return %c0_i32, %arg1 : i32, i32
  }
  func.func @transform_3(%arg0: i32, %arg1: i32) -> (i32, i32) {
    %c0_i32 = arith.constant 0 : i32
    %c0_i32_0 = arith.constant 0 : i32
    return %c0_i32, %arg1 : i32, i32
  }
  func.func @transform_4(%arg0: i32, %arg1: i32) -> (i32, i32) {
    %c0_i32 = arith.constant 0 : i32
    %c0_i32_0 = arith.constant 0 : i32
    return %c0_i32, %arg1 : i32, i32
  }
  func.func @transform_5(%arg0: i32, %arg1: i32) -> (i32, i32) {
    %c0_i32 = arith.constant 0 : i32
    return %arg0, %arg1 : i32, i32
  }
  func.func @transform_6(%arg0: i32, %arg1: i32) -> (i32, i32) {
    %c0_i32 = arith.constant 0 : i32
    return %arg0, %arg1 : i32, i32
  }
}

module attributes {stable_mosaic.version = 11 : i64} {
  func.func @_kv_proj_kernel(%arg0: i32, %arg1: i32, %arg2: memref<8x32xf32, #tpu.memory_space<vmem>>, %arg3: memref<32x32xf32, #tpu.memory_space<vmem>>, %arg4: memref<1x32xf32, #tpu.memory_space<vmem>>, %arg5: memref<32x32xf32, #tpu.memory_space<vmem>>, %arg6: memref<1x32xf32, #tpu.memory_space<vmem>>, %arg7: memref<8x32xf32, #tpu.memory_space<vmem>>, %arg8: memref<8x32xf32, #tpu.memory_space<vmem>>) attributes {dimension_semantics = [#tpu.dimension_semantics<parallel>, #tpu.dimension_semantics<arbitrary>], iteration_bounds = array<i64: 2, 1>, scalar_prefetch = 0 : i64, scratch_operands = 0 : i64, tpu.core_type = #tpu.core_type<tc>, window_params = [{transform_indices = @transform_0, window_bounds = array<i64: 8, 32>}, {transform_indices = @transform_1, window_bounds = array<i64: 32, 32>}, {transform_indices = @transform_2, window_bounds = array<i64: 1, 32>}, {transform_indices = @transform_3, window_bounds = array<i64: 32, 32>}, {transform_indices = @transform_4, window_bounds = array<i64: 1, 32>}, {transform_indices = @transform_5, window_bounds = array<i64: 8, 32>}, {transform_indices = @transform_6, window_bounds = array<i64: 8, 32>}]} {
    %c0 = arith.constant 0 : index
    %c0_0 = arith.constant 0 : index
    %0 = vector.load %arg2[%c0, %c0_0] : memref<8x32xf32, #tpu.memory_space<vmem>>, vector<8x32xf32>
    %c0_1 = arith.constant 0 : index
    %c0_2 = arith.constant 0 : index
    %1 = vector.load %arg3[%c0_1, %c0_2] : memref<32x32xf32, #tpu.memory_space<vmem>>, vector<32x32xf32>
    %cst = arith.constant dense<0.000000e+00> : vector<8x32xf32>
    %2 = tpu.matmul %0, %1, %cst {dimension_numbers = #tpu.dot_dimension_numbers<[1], [0], [0], [1], [0, 0, 1, 1], [], []>} : vector<8x32xf32>, vector<32x32xf32>, vector<8x32xf32> -> vector<8x32xf32>
    %c0_3 = arith.constant 0 : index
    %c0_4 = arith.constant 0 : index
    %3 = vector.load %arg5[%c0_3, %c0_4] : memref<32x32xf32, #tpu.memory_space<vmem>>, vector<32x32xf32>
    %cst_5 = arith.constant dense<0.000000e+00> : vector<8x32xf32>
    %4 = tpu.matmul %0, %3, %cst_5 {dimension_numbers = #tpu.dot_dimension_numbers<[1], [0], [0], [1], [0, 0, 1, 1], [], []>} : vector<8x32xf32>, vector<32x32xf32>, vector<8x32xf32> -> vector<8x32xf32>
    %c0_6 = arith.constant 0 : index
    %c0_7 = arith.constant 0 : index
    %5 = vector.load %arg4[%c0_6, %c0_7] : memref<1x32xf32, #tpu.memory_space<vmem>>, vector<1x32xf32>
    %6 = vector.broadcast %5 : vector<1x32xf32> to vector<8x32xf32>
    %7 = arith.addf %2, %6 : vector<8x32xf32>
    %c0_8 = arith.constant 0 : index
    %c0_9 = arith.constant 0 : index
    %8 = vector.load %arg7[%c0_8, %c0_9] : memref<8x32xf32, #tpu.memory_space<vmem>>, vector<8x32xf32>
    tpu.vector_store %arg7[%c0_8, %c0_9], %7 {strides = array<i32>} : memref<8x32xf32, #tpu.memory_space<vmem>>, vector<8x32xf32>,
    %c0_10 = arith.constant 0 : index
    %c0_11 = arith.constant 0 : index
    %9 = vector.load %arg6[%c0_10, %c0_11] : memref<1x32xf32, #tpu.memory_space<vmem>>, vector<1x32xf32>
    %10 = vector.broadcast %9 : vector<1x32xf32> to vector<8x32xf32>
    %11 = arith.addf %4, %10 : vector<8x32xf32>
    %c0_12 = arith.constant 0 : index
    %c0_13 = arith.constant 0 : index
    %12 = vector.load %arg8[%c0_12, %c0_13] : memref<8x32xf32, #tpu.memory_space<vmem>>, vector<8x32xf32>
    tpu.vector_store %arg8[%c0_12, %c0_13], %11 {strides = array<i32>} : memref<8x32xf32, #tpu.memory_space<vmem>>, vector<8x32xf32>,
    return
  }
  func.func @transform_0(%arg0: i32, %arg1: i32) -> (i32, i32) {
    %c0_i32 = arith.constant 0 : i32
    %c0_i32_0 = arith.constant 0 : i32
    return %arg0, %c0_i32 : i32, i32
  }
  func.func @transform_1(%arg0: i32, %arg1: i32) -> (i32, i32) {
    %c0_i32 = arith.constant 0 : i32
    %c0_i32_0 = arith.constant 0 : i32
    return %c0_i32, %arg1 : i32, i32
  }
  func.func @transform_2(%arg0: i32, %arg1: i32) -> (i32, i32) {
    %c0_i32 = arith.constant 0 : i32
    %c0_i32_0 = arith.constant 0 : i32
    return %c0_i32, %arg1 : i32, i32
  }
  func.func @transform_3(%arg0: i32, %arg1: i32) -> (i32, i32) {
    %c0_i32 = arith.constant 0 : i32
    %c0_i32_0 = arith.constant 0 : i32
    return %c0_i32, %arg1 : i32, i32
  }
  func.func @transform_4(%arg0: i32, %arg1: i32) -> (i32, i32) {
    %c0_i32 = arith.constant 0 : i32
    %c0_i32_0 = arith.constant 0 : i32
    return %c0_i32, %arg1 : i32, i32
  }
  func.func @transform_5(%arg0: i32, %arg1: i32) -> (i32, i32) {
    %c0_i32 = arith.constant 0 : i32
    return %arg0, %arg1 : i32, i32
  }
  func.func @transform_6(%arg0: i32, %arg1: i32) -> (i32, i32) {
    %c0_i32 = arith.constant 0 : i32
    return %arg0, %arg1 : i32, i32
  }
}

</mosaic_0001>

<llo_original>
// kernel: tpu_custom_call.1
$region0: #{tpu_custom_call.1}
  #allocation0 [shape = 'u32[]', space=smem, size = 0x4, offset = 0x4, fixed_abs, tag = 'smem constant byte address 0x4 - core index']
  #allocation1 [shape = 'u32[144,128]{1,0:T(1,128)}', space=vmem, size = 0x12000, scoped, tag = 'internal scratch']
  %s0 = inlined_call_operand.hbm [shape: f32[16,32], index: 0, kind: input, shape index: {}]
  %s1 = inlined_call_operand.hbm [shape: f32[32,32], index: 1, kind: input, shape index: {}]
  %s2 = inlined_call_operand.vmem [shape: f32[1,32], index: 2, kind: input, shape index: {}]
  %s3 = inlined_call_operand.hbm [shape: f32[32,32], index: 3, kind: input, shape index: {}]
  %s4 = inlined_call_operand.vmem [shape: f32[1,32], index: 4, kind: input, shape index: {}]
  %s5 = inlined_call_operand.hbm [shape: f32[16,32], index: 5, kind: output, shape index: {0}]
  %s6 = inlined_call_operand.hbm [shape: f32[16,32], index: 6, kind: output, shape index: {1}]
  %7 = xla_tuple %s5, %s6
  %s8 = sld [smem:[#allocation0]]
  $region73: #{tpu_custom_call.1} parent=0
    _
  %s10 = ssub.s32 1, %s8
  %s11 = scalar_select 0, %s10, %s8
  $region1: #{tpu_custom_call.1} parent=0
    #allocation2 [shape = 'u8[8192]{0}', space=vmem, size = 0x2000, scoped, tag = 'input window, operand 0']
    #allocation3 [shape = 's32[2]{0}', space=sflag, size = 0x8, scoped, tag = 'scoped memory for tpu_custom_call.1']
    #allocation4 [shape = 's32[2]{0}', space=sflag, size = 0x8, scoped, tag = 'scoped memory for tpu_custom_call.1']
    #allocation5 [shape = 'u8[16384]{0}', space=vmem, size = 0x4000, scoped, tag = 'input window, operand 1, single buffered']
    #allocation6 [shape = 's32[1]{0}', space=sflag, size = 0x4, scoped, tag = 'scoped memory for tpu_custom_call.1']
    #allocation7 [shape = 'u8[16384]{0}', space=vmem, size = 0x4000, scoped, tag = 'input window, operand 3, single buffered']
    #allocation8 [shape = 'u8[8192]{0}', space=vmem, size = 0x2000, scoped, tag = 'output window, operand 0']
    #allocation9 [shape = 'u8[8192]{0}', space=vmem, size = 0x2000, scoped, tag = 'output window, operand 1']
    #allocation10 [shape = 's32[2]{0}', space=sflag, size = 0x8, scoped, tag = 'scoped memory for tpu_custom_call.1']
    %12 = vsyncpa [#allocation3], 0
    %s13 = scalar_lea.sflag [#allocation3], 1
    %14 = vsyncpa %s13, 0
    %15 = vsyncpa [#allocation6], 0
    %16 = vsyncpa [#allocation4], 0
    %s17 = scalar_lea.sflag [#allocation4], 1
    %18 = vsyncpa %s17, 0
    %19 = vsyncpa [#allocation10], 0
    %s20 = scalar_lea.sflag [#allocation10], 1
    %21 = vsyncpa %s20, 0
    loop: start=0, step=1, limit=4
    $region2: #{tpu_custom_call.1} parent=1 // loop_pre_header
      _
    $region3: #{tpu_custom_call.1} parent=1 // loop_header
      %s23 = sphi 0, %s27
      %p24 = scmp.ge.s32.totalorder %s23, 4
      %s30 = sphi 0, %s42
      %s31 = sphi 0, %s38
      %s32 = sphi 0, %s30
      %s33 = sphi 0, %s31
      %s34 = sphi 0, %s32
      %s35 = sphi 0, %s33
      %s45 = sphi 0, %s47
      %s48 = sphi 0, %s45
      %s49 = sphi 0, %s48
      %s65 = sphi 0, %s49
      %s71 = sphi 0, %s73
      %s74 = sphi 0, %s71
      %s75 = sphi 0, %s74
      %s91 = sphi 0, %s75
      %s97 = sphi 0, %s99
      %s100 = sphi 0, %s97
      %s101 = sphi 0, %s100
      %s117 = sphi 0, %s101
      %s123 = sphi 0, %s125
      %s126 = sphi 0, %s123
      %s127 = sphi 0, %s126
      %s143 = sphi 0, %s127
      %s149 = sphi 0, %s151
      %s152 = sphi 0, %s149
      %s153 = sphi 0, %s152
      %s169 = sphi 0, %s153
      %s177 = sphi 0, %s179
      %s180 = sphi 0, %s177
      %s181 = sphi 0, %s180
      %s197 = sphi 0, %s181
      %s205 = sphi 0, %s207
      %s208 = sphi 0, %s205
      %s209 = sphi 0, %s208
      %s225 = sphi 0, %s209
    $region4: #{tpu_custom_call.1} parent=1 // loop_header_branch
      %26 = sbr.rel (%p24) target = $region8
    $region5: #{tpu_custom_call.1} parent=1 // loop_body
      %s28 = ssub.s32 %s23, 1
      %s29 = ssub.s32 %s23, 2
      %s36 = sadd.s32 1, %s31
      %p37 = scmp.ge.s32.totalorder %s36, 1
      %s38 = scalar_select %p37, 0, %s36
      %s39 = sadd.s32 1, %s30
      %s40 = scalar_select %p37, %s39, %s30
      %p41 = scmp.ge.s32.totalorder %s40, 2
      %s42 = scalar_select %p41, 0, %s40
      %s43 = ssub.s32 %s30, %s42
      %p44 = scmp.eq.s32.totalorder %s43, 0
      %s46 = sadd.s32 %s45, 1
      %s47 = scalar_select %p44, %s45, %s46
      %p50 = pneg %p44
      %p51 = scmp.eq.s32.totalorder %s23, 1
      %p52 = por %p50, %p51
      %p53 = scmp.ne.s32.totalorder %s45, %s48
      %p54 = scmp.eq.s32.totalorder %s23, 0
      %p55 = por %p53, %p54
      %p56 = scmp.ne.s32.totalorder %s45, %s48
      %p57 = scmp.eq.s32.totalorder %s28, 1
      %p58 = por %p56, %p57
      %p59 = scmp.ne.s32.totalorder %s48, %s49
      %p60 = scmp.eq.s32.totalorder %s28, 0
      %p61 = por %p59, %p60
      %p62 = scmp.ne.s32.totalorder %s48, %s49
      %p63 = scmp.eq.s32.totalorder %s29, 1
      %p64 = por %p62, %p63
      %p66 = scmp.ne.s32.totalorder %s49, %s65
      %p67 = scmp.eq.s32.totalorder %s29, 0
      %p68 = por %p66, %p67
      %s69 = ssub.s32 %s31, %s38
      %p70 = scmp.eq.s32.totalorder %s69, 0
      %s72 = sadd.s32 %s71, 1
      %s73 = scalar_select %p70, %s71, %s72
      %p76 = pneg %p70
      %p77 = scmp.eq.s32.totalorder %s23, 1
      %p78 = por %p76, %p77
      %p79 = scmp.ne.s32.totalorder %s71, %s74
      %p80 = scmp.eq.s32.totalorder %s23, 0
      %p81 = por %p79, %p80
      %p82 = scmp.ne.s32.totalorder %s71, %s74
      %p83 = scmp.eq.s32.totalorder %s28, 1
      %p84 = por %p82, %p83
      %p85 = scmp.ne.s32.totalorder %s74, %s75
      %p86 = scmp.eq.s32.totalorder %s28, 0
      %p87 = por %p85, %p86
      %p88 = scmp.ne.s32.totalorder %s74, %s75
      %p89 = scmp.eq.s32.totalorder %s29, 1
      %p90 = por %p88, %p89
      %p92 = scmp.ne.s32.totalorder %s75, %s91
      %p93 = scmp.eq.s32.totalorder %s29, 0
      %p94 = por %p92, %p93
      %s95 = ssub.s32 %s31, %s38
      %p96 = scmp.eq.s32.totalorder %s95, 0
      %s98 = sadd.s32 %s97, 1
      %s99 = scalar_select %p96, %s97, %s98
      %p102 = pneg %p96
      %p103 = scmp.eq.s32.totalorder %s23, 1
      %p104 = por %p102, %p103
      %p105 = scmp.ne.s32.totalorder %s97, %s100
      %p106 = scmp.eq.s32.totalorder %s23, 0
      %p107 = por %p105, %p106
      %p108 = scmp.ne.s32.totalorder %s97, %s100
      %p109 = scmp.eq.s32.totalorder %s28, 1
      %p110 = por %p108, %p109
      %p111 = scmp.ne.s32.totalorder %s100, %s101
      %p112 = scmp.eq.s32.totalorder %s28, 0
      %p113 = por %p111, %p112
      %p114 = scmp.ne.s32.totalorder %s100, %s101
      %p115 = scmp.eq.s32.totalorder %s29, 1
      %p116 = por %p114, %p115
      %p118 = scmp.ne.s32.totalorder %s101, %s117
      %p119 = scmp.eq.s32.totalorder %s29, 0
      %p120 = por %p118, %p119
      %s121 = ssub.s32 %s31, %s38
      %p122 = scmp.eq.s32.totalorder %s121, 0
      %s124 = sadd.s32 %s123, 1
      %s125 = scalar_select %p122, %s123, %s124
      %p128 = pneg %p122
      %p129 = scmp.eq.s32.totalorder %s23, 1
      %p130 = por %p128, %p129
      %p131 = scmp.ne.s32.totalorder %s123, %s126
      %p132 = scmp.eq.s32.totalorder %s23, 0
      %p133 = por %p131, %p132
      %p134 = scmp.ne.s32.totalorder %s123, %s126
      %p135 = scmp.eq.s32.totalorder %s28, 1
      %p136 = por %p134, %p135
      %p137 = scmp.ne.s32.totalorder %s126, %s127
      %p138 = scmp.eq.s32.totalorder %s28, 0
      %p139 = por %p137, %p138
      %p140 = scmp.ne.s32.totalorder %s126, %s127
      %p141 = scmp.eq.s32.totalorder %s29, 1
      %p142 = por %p140, %p141
      %p144 = scmp.ne.s32.totalorder %s127, %s143
      %p145 = scmp.eq.s32.totalorder %s29, 0
      %p146 = por %p144, %p145
      %s147 = ssub.s32 %s31, %s38
      %p148 = scmp.eq.s32.totalorder %s147, 0
      %s150 = sadd.s32 %s149, 1
      %s151 = scalar_select %p148, %s149, %s150
      %p154 = pneg %p148
      %p155 = scmp.eq.s32.totalorder %s23, 1
      %p156 = por %p154, %p155
      %p157 = scmp.ne.s32.totalorder %s149, %s152
      %p158 = scmp.eq.s32.totalorder %s23, 0
      %p159 = por %p157, %p158
      %p160 = scmp.ne.s32.totalorder %s149, %s152
      %p161 = scmp.eq.s32.totalorder %s28, 1
      %p162 = por %p160, %p161
      %p163 = scmp.ne.s32.totalorder %s152, %s153
      %p164 = scmp.eq.s32.totalorder %s28, 0
      %p165 = por %p163, %p164
      %p166 = scmp.ne.s32.totalorder %s152, %s153
      %p167 = scmp.eq.s32.totalorder %s29, 1
      %p168 = por %p166, %p167
      %p170 = scmp.ne.s32.totalorder %s153, %s169
      %p171 = scmp.eq.s32.totalorder %s29, 0
      %p172 = por %p170, %p171
      %s173 = ssub.s32 %s30, %s42
      %s174 = ssub.s32 %s31, %s38
      %s175 = sor.u32 %s173, %s174
      %p176 = scmp.eq.s32.totalorder %s175, 0
      %s178 = sadd.s32 %s177, 1
      %s179 = scalar_select %p176, %s177, %s178
      %p182 = pneg %p176
      %p183 = scmp.eq.s32.totalorder %s23, 1
      %p184 = por %p182, %p183
      %p185 = scmp.ne.s32.totalorder %s177, %s180
      %p186 = scmp.eq.s32.totalorder %s23, 0
      %p187 = por %p185, %p186
      %p188 = scmp.ne.s32.totalorder %s177, %s180
      %p189 = scmp.eq.s32.totalorder %s28, 1
      %p190 = por %p188, %p189
      %p191 = scmp.ne.s32.totalorder %s180, %s181
      %p192 = scmp.eq.s32.totalorder %s28, 0
      %p193 = por %p191, %p192
      %p194 = scmp.ne.s32.totalorder %s180, %s181
      %p195 = scmp.eq.s32.totalorder %s29, 1
      %p196 = por %p194, %p195
      %p198 = scmp.ne.s32.totalorder %s181, %s197
      %p199 = scmp.eq.s32.totalorder %s29, 0
      %p200 = por %p198, %p199
      %s201 = ssub.s32 %s30, %s42
      %s202 = ssub.s32 %s31, %s38
      %s203 = sor.u32 %s201, %s202
      %p204 = scmp.eq.s32.totalorder %s203, 0
      %s206 = sadd.s32 %s205, 1
      %s207 = scalar_select %p204, %s205, %s206
      %p210 = pneg %p204
      %p211 = scmp.eq.s32.totalorder %s23, 1
      %p212 = por %p210, %p211
      %p213 = scmp.ne.s32.totalorder %s205, %s208
      %p214 = scmp.eq.s32.totalorder %s23, 0
      %p215 = por %p213, %p214
      %p216 = scmp.ne.s32.totalorder %s205, %s208
      %p217 = scmp.eq.s32.totalorder %s28, 1
      %p218 = por %p216, %p217
      %p219 = scmp.ne.s32.totalorder %s208, %s209
      %p220 = scmp.eq.s32.totalorder %s28, 0
      %p221 = por %p219, %p220
      %p222 = scmp.ne.s32.totalorder %s208, %s209
      %p223 = scmp.eq.s32.totalorder %s29, 1
      %p224 = por %p222, %p223
      %p226 = scmp.ne.s32.totalorder %s209, %s225
      %p227 = scmp.eq.s32.totalorder %s29, 0
      %p228 = por %p226, %p227
      %p229 = scmp.le.s32.totalorder 1, %s23
      %p230 = scmp.lt.s32.totalorder %s23, 3
      %p231 = pnand %p229, %p230
      %p232 = pneg %p231
      // Predicated region
      $region9: #{tpu_custom_call.1} parent=5 // pred_check
        _
      $region10: #{tpu_custom_call.1} parent=5 // pred_check_branch
        %234 = sbr.rel (%p231) target = $region12
      $region11: #{tpu_custom_call.1} parent=5 // pred_region
        %s235 = ssub.s32 %s23, 1
        // Predicated region
        $region13: #{tpu_custom_call.1} parent=11 // pred_check
          %p236 = pneg %p87
        $region14: #{tpu_custom_call.1} parent=11 // pred_check_branch
          %238 = sbr.rel (%p236) target = $region16
        $region15: #{tpu_custom_call.1} parent=11 // pred_region
          %s240 = ssub.s32 512, 512
          %241 = vsyncadd [#allocation6], %s240
          %s242 = smul.addr %s33, 128
          %s243 = scalar_lea.hbm %s1, %s242
          %s244 = sshll.u32 [#allocation5], 4
          %s245 = int_to_ptr.vmem [resolvable:$true] %s244
          %250 = dma.hbm_to_vmem [thread:$0]  %s243, 512, %s245, [#allocation6], 128, 128, 8
        $region16: #{tpu_custom_call.1} parent=11 // pred_fallthru
          _
        // Predicated region
        $region17: #{tpu_custom_call.1} parent=11 // pred_check
          %p251 = pneg %p113
        $region18: #{tpu_custom_call.1} parent=11 // pred_check_branch
          %253 = sbr.rel (%p251) target = $region20
        $region19: #{tpu_custom_call.1} parent=11 // pred_region
          %p254 = scmp.lt.s32.totalorder %s33, 0
          %s255 = scalar_select %p254, %s33, 0
          %s256 = scalar_lea.vmem %s2, %s255
        $region20: #{tpu_custom_call.1} parent=11 // pred_fallthru
          _
        // Predicated region
        $region21: #{tpu_custom_call.1} parent=11 // pred_check
          %p257 = pneg %p139
        $region22: #{tpu_custom_call.1} parent=11 // pred_check_branch
          %259 = sbr.rel (%p257) target = $region24
        $region23: #{tpu_custom_call.1} parent=11 // pred_region
          %s261 = ssub.s32 512, 512
          %262 = vsyncadd [#allocation6], %s261
          %s263 = smul.addr %s33, 128
          %s264 = scalar_lea.hbm %s3, %s263
          %s265 = sshll.u32 [#allocation7], 4
          %s266 = int_to_ptr.vmem [resolvable:$true] %s265
          %271 = dma.hbm_to_vmem [thread:$0]  %s264, 512, %s266, [#allocation6], 128, 128, 8
        $region24: #{tpu_custom_call.1} parent=11 // pred_fallthru
          _
        // Predicated region
        $region25: #{tpu_custom_call.1} parent=11 // pred_check
          %p272 = pneg %p165
        $region26: #{tpu_custom_call.1} parent=11 // pred_check_branch
          %274 = sbr.rel (%p272) target = $region28
        $region27: #{tpu_custom_call.1} parent=11 // pred_region
          %p275 = scmp.lt.s32.totalorder %s33, 0
          %s276 = scalar_select %p275, %s33, 0
          %s277 = scalar_lea.vmem %s4, %s276
        $region28: #{tpu_custom_call.1} parent=11 // pred_fallthru
          _
      $region12: #{tpu_custom_call.1} parent=5 // pred_fallthru
        _
      %p278 = scmp.lt.s32.totalorder %s23, 2
      // Predicated region
      $region29: #{tpu_custom_call.1} parent=5 // pred_check
        %p279 = pneg %p278
      $region30: #{tpu_custom_call.1} parent=5 // pred_check_branch
        %281 = sbr.rel (%p279) target = $region32
      $region31: #{tpu_custom_call.1} parent=5 // pred_region
        // Predicated region
        $region33: #{tpu_custom_call.1} parent=31 // pred_check
          %p282 = pneg %p55
        $region34: #{tpu_custom_call.1} parent=31 // pred_check_branch
          %284 = sbr.rel (%p282) target = $region36
        $region35: #{tpu_custom_call.1} parent=31 // pred_region
          %s285 = sand.u32 %s45, 1
          %s286 = scalar_lea.sflag [#allocation3], %s285
          %s287 = sand.u32 %s45, 1
          %s288 = smul.addr %s287, 8
          %s289 = scalar_lea.vmem [#allocation2], %s288
          %s291 = ssub.s32 128, 128
          %292 = vsyncadd %s286, %s291
          %s293 = smul.addr %s30, 128
          %s294 = scalar_lea.hbm %s0, %s293
          %s296 = sshll.u32 %s289, 4
          %s297 = int_to_ptr.vmem [resolvable:$true] %s296
          %299 = dma.hbm_to_vmem [thread:$0]  %s294, 128, %s297, %s286
        $region36: #{tpu_custom_call.1} parent=31 // pred_fallthru
          _
      $region32: #{tpu_custom_call.1} parent=5 // pred_fallthru
        _
      %p300 = scmp.le.s32.totalorder 1, %s23
      %p301 = scmp.lt.s32.totalorder %s23, 3
      %p302 = pnand %p300, %p301
      %p303 = pneg %p302
      // Predicated region
      $region37: #{tpu_custom_call.1} parent=5 // pred_check
        _
      $region38: #{tpu_custom_call.1} parent=5 // pred_check_branch
        %305 = sbr.rel (%p302) target = $region40
      $region39: #{tpu_custom_call.1} parent=5 // pred_region
        %s306 = ssub.s32 %s23, 1
        %s307 = sand.u32 %s48, 1
        %s308 = scalar_lea.sflag [#allocation3], %s307
        %s309 = sand.u32 %s48, 1
        %s310 = smul.addr %s309, 8
        %s311 = scalar_lea.vmem [#allocation2], %s310
        // Predicated region
        $region41: #{tpu_custom_call.1} parent=39 // pred_check
          %p312 = pneg %p61
        $region42: #{tpu_custom_call.1} parent=39 // pred_check_branch
          %314 = sbr.rel (%p312) target = $region44
        $region43: #{tpu_custom_call.1} parent=39 // pred_region
          %315 = dma.done %s308, 128
        $region44: #{tpu_custom_call.1} parent=39 // pred_fallthru
          _
        // Predicated region
        $region45: #{tpu_custom_call.1} parent=39 // pred_check
          %p316 = pneg %p87
        $region46: #{tpu_custom_call.1} parent=39 // pred_check_branch
          %318 = sbr.rel (%p316) target = $region48
        $region47: #{tpu_custom_call.1} parent=39 // pred_region
          %319 = dma.done [#allocation6], 512
        $region48: #{tpu_custom_call.1} parent=39 // pred_fallthru
          _
        // Predicated region
        $region49: #{tpu_custom_call.1} parent=39 // pred_check
          %p320 = pneg %p139
        $region50: #{tpu_custom_call.1} parent=39 // pred_check_branch
          %322 = sbr.rel (%p320) target = $region52
        $region51: #{tpu_custom_call.1} parent=39 // pred_region
          %323 = dma.done [#allocation6], 512
        $region52: #{tpu_custom_call.1} parent=39 // pred_fallthru
          _
        %s324 = sand.u32 %s48, 1
        %s325 = scalar_lea.sflag [#allocation3], %s324
        %s326 = sand.u32 %s48, 1
        %s327 = smul.addr %s326, 8
        %s328 = scalar_lea.vmem [#allocation2], %s327
        %p329 = pneg %p61
        %p330 = pneg %p58
        %p331 = pneg %p87
        %p332 = pneg %p84
        %p333 = scmp.lt.s32.totalorder %s33, 0
        %s334 = scalar_select %p333, %s33, 0
        %s335 = scalar_lea.vmem %s2, %s334
        %p336 = pneg %p113
        %p337 = pneg %p110
        %p338 = pneg %p139
        %p339 = pneg %p136
        %p340 = scmp.lt.s32.totalorder %s33, 0
        %s341 = scalar_select %p340, %s33, 0
        %s342 = scalar_lea.vmem %s4, %s341
        %p343 = pneg %p165
        %p344 = pneg %p162
        %p345 = pneg %p193
        %p346 = pneg %p190
        %s347 = sand.u32 %s180, 1
        %s348 = scalar_lea.sflag [#allocation4], %s347
        %s349 = sand.u32 %s180, 1
        %s350 = smul.addr %s349, 8
        %s351 = scalar_lea.vmem [#allocation8], %s350
        %p352 = pneg %p221
        %p353 = pneg %p218
        %s354 = sand.u32 %s208, 1
        %s355 = scalar_lea.sflag [#allocation10], %s354
        %s356 = sand.u32 %s208, 1
        %s357 = smul.addr %s356, 8
        %s358 = scalar_lea.vmem [#allocation9], %s357
        %p359 = scmp.lt.s32.totalorder %s33, 0
        %s360 = scalar_select %p359, %s33, 0
        %s361 = scalar_lea.vmem %s2, %s360
        %p362 = scmp.lt.s32.totalorder %s33, 0
        %s363 = scalar_select %p362, %s33, 0
        %s364 = scalar_lea.vmem %s4, %s363
        %v365 = vld [vmem:[%s311] sm:$0xff]
        %v366 = vld [vmem:[#allocation5] sm:$0xff]
        %v367 = vld [vmem:[#allocation5 + $0x8] sm:$0xff]
        %v368 = vld [vmem:[#allocation5 + $0x10] sm:$0xff]
        %v369 = vld [vmem:[#allocation5 + $0x18] sm:$0xff]
        %v370 = vld [vmem:[#allocation7] sm:$0xff]
        %v371 = vld [vmem:[#allocation7 + $0x8] sm:$0xff]
        %v372 = vld [vmem:[#allocation7 + $0x10] sm:$0xff]
        %v373 = vld [vmem:[#allocation7 + $0x18] sm:$0xff]
        %v374 = vld [vmem:[%s361] sm:$0x1]
        %v376 = vlaneseq
        %v377 = vshrl.u32 %v376, 7
        %v378 = vsub.s32 0, %v377
        %v379 = vrot.slane %v374, %v378
        %vm381 = vcmask 261120
        %v383 = vsel %vm381, %v365, 0
        %385 = vmatprep.subr.mxu0 0.0
        %386 = vmatpush1.msra.mxu0 %v366
        %387 = vmatprep.subr.mxu0 0.0
        %388 = vmatpush1.msra.mxu0 %v367
        %389 = vmatprep.subr.mxu0 0.0
        %390 = vmatpush1.msra.mxu0 %v368
        %391 = vmatprep.subr.mxu0 0.0
        %392 = vmatpush1.msra.mxu0 %v369
        %393 = vmatprep.subr.mxu0 0.0
        %394 = vmatpush1.msra.mxu0 0.0
        %395 = vmatprep.subr.mxu0 0.0
        %396 = vmatpush1.msra.mxu0 0.0
        %397 = vmatprep.subr.mxu0 0.0
        %398 = vmatpush1.msra.mxu0 0.0
        %399 = vmatprep.subr.mxu0 0.0
        %400 = vmatpush1.msra.mxu0 0.0
        %401 = vmatprep.subr.mxu0 0.0
        %402 = vmatpush1.msra.mxu0 0.0
        %403 = vmatprep.subr.mxu0 0.0
        %404 = vmatpush1.msra.mxu0 0.0
        %405 = vmatprep.subr.mxu0 0.0
        %406 = vmatpush1.msra.mxu0 0.0
        %407 = vmatprep.subr.mxu0 0.0
        %408 = vmatpush1.msra.mxu0 0.0
        %409 = vmatprep.subr.mxu0 0.0
        %410 = vmatpush1.msra.mxu0 0.0
        %411 = vmatprep.subr.mxu0 0.0
        %412 = vmatpush1.msra.mxu0 0.0
        %413 = vmatprep.subr.mxu0 0.0
        %414 = vmatpush1.msra.mxu0 0.0
        %415 = vmatprep.subr.mxu0 0.0
        %416 = vmatpush1.msra.mxu0 0.0
        %417 = vmatprep.subr.mxu0 0.0
        %418 = vmatpush1.msra.mxu0 0.0
        %419 = vmatprep.subr.mxu0 0.0
        %420 = vmatpush1.msra.mxu0 0.0
        %421 = vmatprep.subr.mxu0 0.0
        %422 = vmatpush1.msra.mxu0 0.0
        %423 = vmatprep.subr.mxu0 0.0
        %424 = vmatpush1.msra.mxu0 0.0
        %425 = vmatprep.subr.mxu0 0.0
        %426 = vmatpush1.msra.mxu0 0.0
        %427 = vmatprep.subr.mxu0 0.0
        %428 = vmatpush1.msra.mxu0 0.0
        %429 = vmatprep.subr.mxu0 0.0
        %430 = vmatpush1.msra.mxu0 0.0
        %431 = vmatprep.subr.mxu0 0.0
        %432 = vmatpush1.msra.mxu0 0.0
        %433 = vmatprep.subr.mxu0 0.0
        %434 = vmatpush1.msra.mxu0 0.0
        %435 = vmatprep.subr.mxu0 0.0
        %436 = vmatpush1.msra.mxu0 0.0
        %437 = vmatprep.subr.mxu0 0.0
        %438 = vmatpush1.msra.mxu0 0.0
        %439 = vmatprep.subr.mxu0 0.0
        %440 = vmatpush1.msra.mxu0 0.0
        %441 = vmatprep.subr.mxu0 0.0
        %442 = vmatpush1.msra.mxu0 0.0
        %443 = vmatprep.subr.mxu0 0.0
        %444 = vmatpush1.msra.mxu0 0.0
        %445 = vmatprep.subr.mxu0 0.0
        %446 = vmatpush1.msra.mxu0 0.0
        %447 = vmatprep.subr.mxu0 0.0
        %448 = vmatpush1.msra.mxu0 0.0
        %449 = vmatprep.mubr.f32.mxu0 0.0
        %450 = vmatmul.mubr.f32.gmra.mrb[0].mxu0 %v383
        %v451 = vpop.f32.mrb[0].mxu0
        %v452 = vadd.f32 %v379, %v451
        %v453 = vpop.f32.mrb[0].mxu0
        %454 = vdwg.mxu0
        %455 = vst.msk [vmem:[%s351] sm:$0xff] %vm381, %v452
        %v456 = vld [vmem:[%s364] sm:$0x1]
        %v458 = vlaneseq
        %v459 = vshrl.u32 %v458, 7
        %v460 = vsub.s32 0, %v459
        %v461 = vrot.slane %v456, %v460
        %463 = vmatprep.subr.mxu0 0.0
        %464 = vmatpush1.msra.mxu0 %v370
        %465 = vmatprep.subr.mxu0 0.0
        %466 = vmatpush1.msra.mxu0 %v371
        %467 = vmatprep.subr.mxu0 0.0
        %468 = vmatpush1.msra.mxu0 %v372
        %469 = vmatprep.subr.mxu0 0.0
        %470 = vmatpush1.msra.mxu0 %v373
        %471 = vmatprep.subr.mxu0 0.0
        %472 = vmatpush1.msra.mxu0 0.0
        %473 = vmatprep.subr.mxu0 0.0
        %474 = vmatpush1.msra.mxu0 0.0
        %475 = vmatprep.subr.mxu0 0.0
        %476 = vmatpush1.msra.mxu0 0.0
        %477 = vmatprep.subr.mxu0 0.0
        %478 = vmatpush1.msra.mxu0 0.0
        %479 = vmatprep.subr.mxu0 0.0
        %480 = vmatpush1.msra.mxu0 0.0
        %481 = vmatprep.subr.mxu0 0.0
        %482 = vmatpush1.msra.mxu0 0.0
        %483 = vmatprep.subr.mxu0 0.0
        %484 = vmatpush1.msra.mxu0 0.0
        %485 = vmatprep.subr.mxu0 0.0
        %486 = vmatpush1.msra.mxu0 0.0
        %487 = vmatprep.subr.mxu0 0.0
        %488 = vmatpush1.msra.mxu0 0.0
        %489 = vmatprep.subr.mxu0 0.0
        %490 = vmatpush1.msra.mxu0 0.0
        %491 = vmatprep.subr.mxu0 0.0
        %492 = vmatpush1.msra.mxu0 0.0
        %493 = vmatprep.subr.mxu0 0.0
        %494 = vmatpush1.msra.mxu0 0.0
        %495 = vmatprep.subr.mxu0 0.0
        %496 = vmatpush1.msra.mxu0 0.0
        %497 = vmatprep.subr.mxu0 0.0
        %498 = vmatpush1.msra.mxu0 0.0
        %499 = vmatprep.subr.mxu0 0.0
        %500 = vmatpush1.msra.mxu0 0.0
        %501 = vmatprep.subr.mxu0 0.0
        %502 = vmatpush1.msra.mxu0 0.0
        %503 = vmatprep.subr.mxu0 0.0
        %504 = vmatpush1.msra.mxu0 0.0
        %505 = vmatprep.subr.mxu0 0.0
        %506 = vmatpush1.msra.mxu0 0.0
        %507 = vmatprep.subr.mxu0 0.0
        %508 = vmatpush1.msra.mxu0 0.0
        %509 = vmatprep.subr.mxu0 0.0
        %510 = vmatpush1.msra.mxu0 0.0
        %511 = vmatprep.subr.mxu0 0.0
        %512 = vmatpush1.msra.mxu0 0.0
        %513 = vmatprep.subr.mxu0 0.0
        %514 = vmatpush1.msra.mxu0 0.0
        %515 = vmatprep.subr.mxu0 0.0
        %516 = vmatpush1.msra.mxu0 0.0
        %517 = vmatprep.subr.mxu0 0.0
        %518 = vmatpush1.msra.mxu0 0.0
        %519 = vmatprep.subr.mxu0 0.0
        %520 = vmatpush1.msra.mxu0 0.0
        %521 = vmatprep.subr.mxu0 0.0
        %522 = vmatpush1.msra.mxu0 0.0
        %523 = vmatprep.subr.mxu0 0.0
        %524 = vmatpush1.msra.mxu0 0.0
        %525 = vmatprep.subr.mxu0 0.0
        %526 = vmatpush1.msra.mxu0 0.0
        %527 = vmatprep.mubr.f32.mxu0 0.0
        %528 = vmatmul.mubr.f32.gmra.mrb[0].mxu0 %v383
        %v529 = vpop.f32.mrb[0].mxu0
        %v530 = vadd.f32 %v461, %v529
        %v531 = vpop.f32.mrb[0].mxu0
        %532 = vdwg.mxu0
        %533 = vst.msk [vmem:[%s358] sm:$0xff] %vm381, %v530
        %s534 = sand.u32 %s180, 1
        %s535 = scalar_lea.sflag [#allocation4], %s534
        %s536 = sand.u32 %s180, 1
        %s537 = smul.addr %s536, 8
        %s538 = scalar_lea.vmem [#allocation8], %s537
        %s539 = sand.u32 %s208, 1
        %s540 = scalar_lea.sflag [#allocation10], %s539
        %s541 = sand.u32 %s208, 1
        %s542 = smul.addr %s541, 8
        %s543 = scalar_lea.vmem [#allocation9], %s542
        // Predicated region
        $region53: #{tpu_custom_call.1} parent=39 // pred_check
          %p544 = pneg %p190
        $region54: #{tpu_custom_call.1} parent=39 // pred_check_branch
          %546 = sbr.rel (%p544) target = $region56
        $region55: #{tpu_custom_call.1} parent=39 // pred_region
          %s548 = ssub.s32 128, 128
          %549 = vsyncadd %s535, %s548
          %s550 = sadd.s32 %s33, %s32
          %s551 = smul.addr %s550, 128
          %s552 = scalar_lea.hbm %s5, %s551
          %s554 = sshll.u32 %s538, 4
          %s555 = int_to_ptr.vmem [resolvable:$true] %s554
          %557 = dma.vmem_to_hbm [thread:$0]  %s555, 128, %s552, %s535
        $region56: #{tpu_custom_call.1} parent=39 // pred_fallthru
          _
        // Predicated region
        $region57: #{tpu_custom_call.1} parent=39 // pred_check
          %p558 = pneg %p218
        $region58: #{tpu_custom_call.1} parent=39 // pred_check_branch
          %560 = sbr.rel (%p558) target = $region60
        $region59: #{tpu_custom_call.1} parent=39 // pred_region
          %s562 = ssub.s32 128, 128
          %563 = vsyncadd %s540, %s562
          %s564 = sadd.s32 %s33, %s32
          %s565 = smul.addr %s564, 128
          %s566 = scalar_lea.hbm %s6, %s565
          %s568 = sshll.u32 %s543, 4
          %s569 = int_to_ptr.vmem [resolvable:$true] %s568
          %571 = dma.vmem_to_hbm [thread:$0]  %s569, 128, %s566, %s540
        $region60: #{tpu_custom_call.1} parent=39 // pred_fallthru
          _
      $region40: #{tpu_custom_call.1} parent=5 // pred_fallthru
        _
      %p572 = scmp.le.s32.totalorder 2, %s23
      // Predicated region
      $region61: #{tpu_custom_call.1} parent=5 // pred_check
        %p573 = pneg %p572
      $region62: #{tpu_custom_call.1} parent=5 // pred_check_branch
        %575 = sbr.rel (%p573) target = $region64
      $region63: #{tpu_custom_call.1} parent=5 // pred_region
        %s576 = ssub.s32 %s23, 2
        // Predicated region
        $region65: #{tpu_custom_call.1} parent=63 // pred_check
          %p577 = pneg %p196
        $region66: #{tpu_custom_call.1} parent=63 // pred_check_branch
          %579 = sbr.rel (%p577) target = $region68
        $region67: #{tpu_custom_call.1} parent=63 // pred_region
          %s580 = sand.u32 %s181, 1
          %s581 = scalar_lea.sflag [#allocation4], %s580
          %s582 = sand.u32 %s181, 1
          %s583 = smul.addr %s582, 8
          %s584 = scalar_lea.vmem [#allocation8], %s583
          %585 = dma.done %s581, 128
        $region68: #{tpu_custom_call.1} parent=63 // pred_fallthru
          _
        // Predicated region
        $region69: #{tpu_custom_call.1} parent=63 // pred_check
          %p586 = pneg %p224
        $region70: #{tpu_custom_call.1} parent=63 // pred_check_branch
          %588 = sbr.rel (%p586) target = $region72
        $region71: #{tpu_custom_call.1} parent=63 // pred_region
          %s589 = sand.u32 %s209, 1
          %s590 = scalar_lea.sflag [#allocation10], %s589
          %s591 = sand.u32 %s209, 1
          %s592 = smul.addr %s591, 8
          %s593 = scalar_lea.vmem [#allocation9], %s592
          %594 = dma.done %s590, 128
        $region72: #{tpu_custom_call.1} parent=63 // pred_fallthru
          _
      $region64: #{tpu_custom_call.1} parent=5 // pred_fallthru
        _
    $region6: #{tpu_custom_call.1} parent=1 // loop_footer
      %s27 = sadd.s32 1, %s23
    $region7: #{tpu_custom_call.1} parent=1 // loop_footer_branch
      %22 = sbr.rel target = $region3
    $region8: #{tpu_custom_call.1} parent=1 // loop_exit
      _
    %595 = vsyncpa [#allocation3], 1
    %s596 = scalar_lea.sflag [#allocation3], 1
    %597 = vsyncpa %s596, 1
    %598 = vsyncpa [#allocation6], 1
    %599 = vsyncpa [#allocation4], 1
    %s600 = scalar_lea.sflag [#allocation4], 1
    %601 = vsyncpa %s600, 1
    %602 = vsyncpa [#allocation10], 1
    %s603 = scalar_lea.sflag [#allocation10], 1
    %604 = vsyncpa %s603, 1

// kernel: tpu_custom_call.1
$region0: #{tpu_custom_call.1}
  #allocation0 [shape = 'u32[]', space=smem, size = 0x4, offset = 0x4, fixed_abs, tag = 'smem constant byte address 0x4 - core index']
  #allocation1 [shape = 'u32[144,128]{1,0:T(1,128)}', space=vmem, size = 0x12000, scoped, tag = 'internal scratch']
  %s0 = inlined_call_operand.hbm [shape: f32[16,32], index: 0, kind: input, shape index: {}]
  %s1 = inlined_call_operand.hbm [shape: f32[32,32], index: 1, kind: input, shape index: {}]
  %s2 = inlined_call_operand.vmem [shape: f32[1,32], index: 2, kind: input, shape index: {}]
  %s3 = inlined_call_operand.hbm [shape: f32[32,32], index: 3, kind: input, shape index: {}]
  %s4 = inlined_call_operand.vmem [shape: f32[1,32], index: 4, kind: input, shape index: {}]
  %s5 = inlined_call_operand.hbm [shape: f32[16,32], index: 5, kind: output, shape index: {0}]
  %s6 = inlined_call_operand.hbm [shape: f32[16,32], index: 6, kind: output, shape index: {1}]
  %7 = xla_tuple %s5, %s6
  %s8 = sld [smem:[#allocation0]]
  $region73: #{tpu_custom_call.1} parent=0
    _
  %s10 = ssub.s32 1, %s8
  %s11 = scalar_select 0, %s10, %s8
  $region1: #{tpu_custom_call.1} parent=0
    #allocation2 [shape = 'u8[8192]{0}', space=vmem, size = 0x2000, scoped, tag = 'input window, operand 0']
    #allocation3 [shape = 's32[2]{0}', space=sflag, size = 0x8, scoped, tag = 'scoped memory for tpu_custom_call.1']
    #allocation4 [shape = 's32[2]{0}', space=sflag, size = 0x8, scoped, tag = 'scoped memory for tpu_custom_call.1']
    #allocation5 [shape = 'u8[16384]{0}', space=vmem, size = 0x4000, scoped, tag = 'input window, operand 1, single buffered']
    #allocation6 [shape = 's32[1]{0}', space=sflag, size = 0x4, scoped, tag = 'scoped memory for tpu_custom_call.1']
    #allocation7 [shape = 'u8[16384]{0}', space=vmem, size = 0x4000, scoped, tag = 'input window, operand 3, single buffered']
    #allocation8 [shape = 'u8[8192]{0}', space=vmem, size = 0x2000, scoped, tag = 'output window, operand 0']
    #allocation9 [shape = 'u8[8192]{0}', space=vmem, size = 0x2000, scoped, tag = 'output window, operand 1']
    #allocation10 [shape = 's32[2]{0}', space=sflag, size = 0x8, scoped, tag = 'scoped memory for tpu_custom_call.1']
    %12 = vsyncpa [#allocation3], 0
    %s13 = scalar_lea.sflag [#allocation3], 1
    %14 = vsyncpa %s13, 0
    %15 = vsyncpa [#allocation6], 0
    %16 = vsyncpa [#allocation4], 0
    %s17 = scalar_lea.sflag [#allocation4], 1
    %18 = vsyncpa %s17, 0
    %19 = vsyncpa [#allocation10], 0
    %s20 = scalar_lea.sflag [#allocation10], 1
    %21 = vsyncpa %s20, 0
    loop: start=0, step=1, limit=4
    $region2: #{tpu_custom_call.1} parent=1 // loop_pre_header
      _
    $region3: #{tpu_custom_call.1} parent=1 // loop_header
      %s23 = sphi 0, %s27
      %p24 = scmp.ge.s32.totalorder %s23, 4
      %s30 = sphi 0, %s42
      %s31 = sphi 0, %s38
      %s32 = sphi 0, %s30
      %s33 = sphi 0, %s31
      %s34 = sphi 0, %s32
      %s35 = sphi 0, %s33
      %s45 = sphi 0, %s47
      %s48 = sphi 0, %s45
      %s49 = sphi 0, %s48
      %s65 = sphi 0, %s49
      %s71 = sphi 0, %s73
      %s74 = sphi 0, %s71
      %s75 = sphi 0, %s74
      %s91 = sphi 0, %s75
      %s97 = sphi 0, %s99
      %s100 = sphi 0, %s97
      %s101 = sphi 0, %s100
      %s117 = sphi 0, %s101
      %s123 = sphi 0, %s125
      %s126 = sphi 0, %s123
      %s127 = sphi 0, %s126
      %s143 = sphi 0, %s127
      %s149 = sphi 0, %s151
      %s152 = sphi 0, %s149
      %s153 = sphi 0, %s152
      %s169 = sphi 0, %s153
      %s177 = sphi 0, %s179
      %s180 = sphi 0, %s177
      %s181 = sphi 0, %s180
      %s197 = sphi 0, %s181
      %s205 = sphi 0, %s207
      %s208 = sphi 0, %s205
      %s209 = sphi 0, %s208
      %s225 = sphi 0, %s209
    $region4: #{tpu_custom_call.1} parent=1 // loop_header_branch
      %26 = sbr.rel (%p24) target = $region8
    $region5: #{tpu_custom_call.1} parent=1 // loop_body
      %s28 = ssub.s32 %s23, 1
      %s29 = ssub.s32 %s23, 2
      %s36 = sadd.s32 1, %s31
      %p37 = scmp.ge.s32.totalorder %s36, 1
      %s38 = scalar_select %p37, 0, %s36
      %s39 = sadd.s32 1, %s30
      %s40 = scalar_select %p37, %s39, %s30
      %p41 = scmp.ge.s32.totalorder %s40, 2
      %s42 = scalar_select %p41, 0, %s40
      %s43 = ssub.s32 %s30, %s42
      %p44 = scmp.eq.s32.totalorder %s43, 0
      %s46 = sadd.s32 %s45, 1
      %s47 = scalar_select %p44, %s45, %s46
      %p50 = pneg %p44
      %p51 = scmp.eq.s32.totalorder %s23, 1
      %p52 = por %p50, %p51
      %p53 = scmp.ne.s32.totalorder %s45, %s48
      %p54 = scmp.eq.s32.totalorder %s23, 0
      %p55 = por %p53, %p54
      %p56 = scmp.ne.s32.totalorder %s45, %s48
      %p57 = scmp.eq.s32.totalorder %s28, 1
      %p58 = por %p56, %p57
      %p59 = scmp.ne.s32.totalorder %s48, %s49
      %p60 = scmp.eq.s32.totalorder %s28, 0
      %p61 = por %p59, %p60
      %p62 = scmp.ne.s32.totalorder %s48, %s49
      %p63 = scmp.eq.s32.totalorder %s29, 1
      %p64 = por %p62, %p63
      %p66 = scmp.ne.s32.totalorder %s49, %s65
      %p67 = scmp.eq.s32.totalorder %s29, 0
      %p68 = por %p66, %p67
      %s69 = ssub.s32 %s31, %s38
      %p70 = scmp.eq.s32.totalorder %s69, 0
      %s72 = sadd.s32 %s71, 1
      %s73 = scalar_select %p70, %s71, %s72
      %p76 = pneg %p70
      %p77 = scmp.eq.s32.totalorder %s23, 1
      %p78 = por %p76, %p77
      %p79 = scmp.ne.s32.totalorder %s71, %s74
      %p80 = scmp.eq.s32.totalorder %s23, 0
      %p81 = por %p79, %p80
      %p82 = scmp.ne.s32.totalorder %s71, %s74
      %p83 = scmp.eq.s32.totalorder %s28, 1
      %p84 = por %p82, %p83
      %p85 = scmp.ne.s32.totalorder %s74, %s75
      %p86 = scmp.eq.s32.totalorder %s28, 0
      %p87 = por %p85, %p86
      %p88 = scmp.ne.s32.totalorder %s74, %s75
      %p89 = scmp.eq.s32.totalorder %s29, 1
      %p90 = por %p88, %p89
      %p92 = scmp.ne.s32.totalorder %s75, %s91
      %p93 = scmp.eq.s32.totalorder %s29, 0
      %p94 = por %p92, %p93
      %s95 = ssub.s32 %s31, %s38
      %p96 = scmp.eq.s32.totalorder %s95, 0
      %s98 = sadd.s32 %s97, 1
      %s99 = scalar_select %p96, %s97, %s98
      %p102 = pneg %p96
      %p103 = scmp.eq.s32.totalorder %s23, 1
      %p104 = por %p102, %p103
      %p105 = scmp.ne.s32.totalorder %s97, %s100
      %p106 = scmp.eq.s32.totalorder %s23, 0
      %p107 = por %p105, %p106
      %p108 = scmp.ne.s32.totalorder %s97, %s100
      %p109 = scmp.eq.s32.totalorder %s28, 1
      %p110 = por %p108, %p109
      %p111 = scmp.ne.s32.totalorder %s100, %s101
      %p112 = scmp.eq.s32.totalorder %s28, 0
      %p113 = por %p111, %p112
      %p114 = scmp.ne.s32.totalorder %s100, %s101
      %p115 = scmp.eq.s32.totalorder %s29, 1
      %p116 = por %p114, %p115
      %p118 = scmp.ne.s32.totalorder %s101, %s117
      %p119 = scmp.eq.s32.totalorder %s29, 0
      %p120 = por %p118, %p119
      %s121 = ssub.s32 %s31, %s38
      %p122 = scmp.eq.s32.totalorder %s121, 0
      %s124 = sadd.s32 %s123, 1
      %s125 = scalar_select %p122, %s123, %s124
      %p128 = pneg %p122
      %p129 = scmp.eq.s32.totalorder %s23, 1
      %p130 = por %p128, %p129
      %p131 = scmp.ne.s32.totalorder %s123, %s126
      %p132 = scmp.eq.s32.totalorder %s23, 0
      %p133 = por %p131, %p132
      %p134 = scmp.ne.s32.totalorder %s123, %s126
      %p135 = scmp.eq.s32.totalorder %s28, 1
      %p136 = por %p134, %p135
      %p137 = scmp.ne.s32.totalorder %s126, %s127
      %p138 = scmp.eq.s32.totalorder %s28, 0
      %p139 = por %p137, %p138
      %p140 = scmp.ne.s32.totalorder %s126, %s127
      %p141 = scmp.eq.s32.totalorder %s29, 1
      %p142 = por %p140, %p141
      %p144 = scmp.ne.s32.totalorder %s127, %s143
      %p145 = scmp.eq.s32.totalorder %s29, 0
      %p146 = por %p144, %p145
      %s147 = ssub.s32 %s31, %s38
      %p148 = scmp.eq.s32.totalorder %s147, 0
      %s150 = sadd.s32 %s149, 1
      %s151 = scalar_select %p148, %s149, %s150
      %p154 = pneg %p148
      %p155 = scmp.eq.s32.totalorder %s23, 1
      %p156 = por %p154, %p155
      %p157 = scmp.ne.s32.totalorder %s149, %s152
      %p158 = scmp.eq.s32.totalorder %s23, 0
      %p159 = por %p157, %p158
      %p160 = scmp.ne.s32.totalorder %s149, %s152
      %p161 = scmp.eq.s32.totalorder %s28, 1
      %p162 = por %p160, %p161
      %p163 = scmp.ne.s32.totalorder %s152, %s153
      %p164 = scmp.eq.s32.totalorder %s28, 0
      %p165 = por %p163, %p164
      %p166 = scmp.ne.s32.totalorder %s152, %s153
      %p167 = scmp.eq.s32.totalorder %s29, 1
      %p168 = por %p166, %p167
      %p170 = scmp.ne.s32.totalorder %s153, %s169
      %p171 = scmp.eq.s32.totalorder %s29, 0
      %p172 = por %p170, %p171
      %s173 = ssub.s32 %s30, %s42
      %s174 = ssub.s32 %s31, %s38
      %s175 = sor.u32 %s173, %s174
      %p176 = scmp.eq.s32.totalorder %s175, 0
      %s178 = sadd.s32 %s177, 1
      %s179 = scalar_select %p176, %s177, %s178
      %p182 = pneg %p176
      %p183 = scmp.eq.s32.totalorder %s23, 1
      %p184 = por %p182, %p183
      %p185 = scmp.ne.s32.totalorder %s177, %s180
      %p186 = scmp.eq.s32.totalorder %s23, 0
      %p187 = por %p185, %p186
      %p188 = scmp.ne.s32.totalorder %s177, %s180
      %p189 = scmp.eq.s32.totalorder %s28, 1
      %p190 = por %p188, %p189
      %p191 = scmp.ne.s32.totalorder %s180, %s181
      %p192 = scmp.eq.s32.totalorder %s28, 0
      %p193 = por %p191, %p192
      %p194 = scmp.ne.s32.totalorder %s180, %s181
      %p195 = scmp.eq.s32.totalorder %s29, 1
      %p196 = por %p194, %p195
      %p198 = scmp.ne.s32.totalorder %s181, %s197
      %p199 = scmp.eq.s32.totalorder %s29, 0
      %p200 = por %p198, %p199
      %s201 = ssub.s32 %s30, %s42
      %s202 = ssub.s32 %s31, %s38
      %s203 = sor.u32 %s201, %s202
      %p204 = scmp.eq.s32.totalorder %s203, 0
      %s206 = sadd.s32 %s205, 1
      %s207 = scalar_select %p204, %s205, %s206
      %p210 = pneg %p204
      %p211 = scmp.eq.s32.totalorder %s23, 1
      %p212 = por %p210, %p211
      %p213 = scmp.ne.s32.totalorder %s205, %s208
      %p214 = scmp.eq.s32.totalorder %s23, 0
      %p215 = por %p213, %p214
      %p216 = scmp.ne.s32.totalorder %s205, %s208
      %p217 = scmp.eq.s32.totalorder %s28, 1
      %p218 = por %p216, %p217
      %p219 = scmp.ne.s32.totalorder %s208, %s209
      %p220 = scmp.eq.s32.totalorder %s28, 0
      %p221 = por %p219, %p220
      %p222 = scmp.ne.s32.totalorder %s208, %s209
      %p223 = scmp.eq.s32.totalorder %s29, 1
      %p224 = por %p222, %p223
      %p226 = scmp.ne.s32.totalorder %s209, %s225
      %p227 = scmp.eq.s32.totalorder %s29, 0
      %p228 = por %p226, %p227
      %p229 = scmp.le.s32.totalorder 1, %s23
      %p230 = scmp.lt.s32.totalorder %s23, 3
      %p231 = pnand %p229, %p230
      %p232 = pneg %p231
      // Predicated region
      $region9: #{tpu_custom_call.1} parent=5 // pred_check
        _
      $region10: #{tpu_custom_call.1} parent=5 // pred_check_branch
        %234 = sbr.rel (%p231) target = $region12
      $region11: #{tpu_custom_call.1} parent=5 // pred_region
        %s235 = ssub.s32 %s23, 1
        // Predicated region
        $region13: #{tpu_custom_call.1} parent=11 // pred_check
          %p236 = pneg %p87
        $region14: #{tpu_custom_call.1} parent=11 // pred_check_branch
          %238 = sbr.rel (%p236) target = $region16
        $region15: #{tpu_custom_call.1} parent=11 // pred_region
          %s240 = ssub.s32 512, 512
          %241 = vsyncadd [#allocation6], %s240
          %s242 = smul.addr %s33, 128
          %s243 = scalar_lea.hbm %s1, %s242
          %s244 = sshll.u32 [#allocation5], 4
          %s245 = int_to_ptr.vmem [resolvable:$true] %s244
          %250 = dma.hbm_to_vmem [thread:$0]  %s243, 512, %s245, [#allocation6], 128, 128, 8
        $region16: #{tpu_custom_call.1} parent=11 // pred_fallthru
          _
        // Predicated region
        $region17: #{tpu_custom_call.1} parent=11 // pred_check
          %p251 = pneg %p113
        $region18: #{tpu_custom_call.1} parent=11 // pred_check_branch
          %253 = sbr.rel (%p251) target = $region20
        $region19: #{tpu_custom_call.1} parent=11 // pred_region
          %p254 = scmp.lt.s32.totalorder %s33, 0
          %s255 = scalar_select %p254, %s33, 0
          %s256 = scalar_lea.vmem %s2, %s255
        $region20: #{tpu_custom_call.1} parent=11 // pred_fallthru
          _
        // Predicated region
        $region21: #{tpu_custom_call.1} parent=11 // pred_check
          %p257 = pneg %p139
        $region22: #{tpu_custom_call.1} parent=11 // pred_check_branch
          %259 = sbr.rel (%p257) target = $region24
        $region23: #{tpu_custom_call.1} parent=11 // pred_region
          %s261 = ssub.s32 512, 512
          %262 = vsyncadd [#allocation6], %s261
          %s263 = smul.addr %s33, 128
          %s264 = scalar_lea.hbm %s3, %s263
          %s265 = sshll.u32 [#allocation7], 4
          %s266 = int_to_ptr.vmem [resolvable:$true] %s265
          %271 = dma.hbm_to_vmem [thread:$0]  %s264, 512, %s266, [#allocation6], 128, 128, 8
        $region24: #{tpu_custom_call.1} parent=11 // pred_fallthru
          _
        // Predicated region
        $region25: #{tpu_custom_call.1} parent=11 // pred_check
          %p272 = pneg %p165
        $region26: #{tpu_custom_call.1} parent=11 // pred_check_branch
          %274 = sbr.rel (%p272) target = $region28
        $region27: #{tpu_custom_call.1} parent=11 // pred_region
          %p275 = scmp.lt.s32.totalorder %s33, 0
          %s276 = scalar_select %p275, %s33, 0
          %s277 = scalar_lea.vmem %s4, %s276
        $region28: #{tpu_custom_call.1} parent=11 // pred_fallthru
          _
      $region12: #{tpu_custom_call.1} parent=5 // pred_fallthru
        _
      %p278 = scmp.lt.s32.totalorder %s23, 2
      // Predicated region
      $region29: #{tpu_custom_call.1} parent=5 // pred_check
        %p279 = pneg %p278
      $region30: #{tpu_custom_call.1} parent=5 // pred_check_branch
        %281 = sbr.rel (%p279) target = $region32
      $region31: #{tpu_custom_call.1} parent=5 // pred_region
        // Predicated region
        $region33: #{tpu_custom_call.1} parent=31 // pred_check
          %p282 = pneg %p55
        $region34: #{tpu_custom_call.1} parent=31 // pred_check_branch
          %284 = sbr.rel (%p282) target = $region36
        $region35: #{tpu_custom_call.1} parent=31 // pred_region
          %s285 = sand.u32 %s45, 1
          %s286 = scalar_lea.sflag [#allocation3], %s285
          %s287 = sand.u32 %s45, 1
          %s288 = smul.addr %s287, 8
          %s289 = scalar_lea.vmem [#allocation2], %s288
          %s291 = ssub.s32 128, 128
          %292 = vsyncadd %s286, %s291
          %s293 = smul.addr %s30, 128
          %s294 = scalar_lea.hbm %s0, %s293
          %s296 = sshll.u32 %s289, 4
          %s297 = int_to_ptr.vmem [resolvable:$true] %s296
          %299 = dma.hbm_to_vmem [thread:$0]  %s294, 128, %s297, %s286
        $region36: #{tpu_custom_call.1} parent=31 // pred_fallthru
          _
      $region32: #{tpu_custom_call.1} parent=5 // pred_fallthru
        _
      %p300 = scmp.le.s32.totalorder 1, %s23
      %p301 = scmp.lt.s32.totalorder %s23, 3
      %p302 = pnand %p300, %p301
      %p303 = pneg %p302
      // Predicated region
      $region37: #{tpu_custom_call.1} parent=5 // pred_check
        _
      $region38: #{tpu_custom_call.1} parent=5 // pred_check_branch
        %305 = sbr.rel (%p302) target = $region40
      $region39: #{tpu_custom_call.1} parent=5 // pred_region
        %s306 = ssub.s32 %s23, 1
        %s307 = sand.u32 %s48, 1
        %s308 = scalar_lea.sflag [#allocation3], %s307
        %s309 = sand.u32 %s48, 1
        %s310 = smul.addr %s309, 8
        %s311 = scalar_lea.vmem [#allocation2], %s310
        // Predicated region
        $region41: #{tpu_custom_call.1} parent=39 // pred_check
          %p312 = pneg %p61
        $region42: #{tpu_custom_call.1} parent=39 // pred_check_branch
          %314 = sbr.rel (%p312) target = $region44
        $region43: #{tpu_custom_call.1} parent=39 // pred_region
          %315 = dma.done %s308, 128
        $region44: #{tpu_custom_call.1} parent=39 // pred_fallthru
          _
        // Predicated region
        $region45: #{tpu_custom_call.1} parent=39 // pred_check
          %p316 = pneg %p87
        $region46: #{tpu_custom_call.1} parent=39 // pred_check_branch
          %318 = sbr.rel (%p316) target = $region48
        $region47: #{tpu_custom_call.1} parent=39 // pred_region
          %319 = dma.done [#allocation6], 512
        $region48: #{tpu_custom_call.1} parent=39 // pred_fallthru
          _
        // Predicated region
        $region49: #{tpu_custom_call.1} parent=39 // pred_check
          %p320 = pneg %p139
        $region50: #{tpu_custom_call.1} parent=39 // pred_check_branch
          %322 = sbr.rel (%p320) target = $region52
        $region51: #{tpu_custom_call.1} parent=39 // pred_region
          %323 = dma.done [#allocation6], 512
        $region52: #{tpu_custom_call.1} parent=39 // pred_fallthru
          _
        %s324 = sand.u32 %s48, 1
        %s325 = scalar_lea.sflag [#allocation3], %s324
        %s326 = sand.u32 %s48, 1
        %s327 = smul.addr %s326, 8
        %s328 = scalar_lea.vmem [#allocation2], %s327
        %p329 = pneg %p61
        %p330 = pneg %p58
        %p331 = pneg %p87
        %p332 = pneg %p84
        %p333 = scmp.lt.s32.totalorder %s33, 0
        %s334 = scalar_select %p333, %s33, 0
        %s335 = scalar_lea.vmem %s2, %s334
        %p336 = pneg %p113
        %p337 = pneg %p110
        %p338 = pneg %p139
        %p339 = pneg %p136
        %p340 = scmp.lt.s32.totalorder %s33, 0
        %s341 = scalar_select %p340, %s33, 0
        %s342 = scalar_lea.vmem %s4, %s341
        %p343 = pneg %p165
        %p344 = pneg %p162
        %p345 = pneg %p193
        %p346 = pneg %p190
        %s347 = sand.u32 %s180, 1
        %s348 = scalar_lea.sflag [#allocation4], %s347
        %s349 = sand.u32 %s180, 1
        %s350 = smul.addr %s349, 8
        %s351 = scalar_lea.vmem [#allocation8], %s350
        %p352 = pneg %p221
        %p353 = pneg %p218
        %s354 = sand.u32 %s208, 1
        %s355 = scalar_lea.sflag [#allocation10], %s354
        %s356 = sand.u32 %s208, 1
        %s357 = smul.addr %s356, 8
        %s358 = scalar_lea.vmem [#allocation9], %s357
        %p359 = scmp.lt.s32.totalorder %s33, 0
        %s360 = scalar_select %p359, %s33, 0
        %s361 = scalar_lea.vmem %s2, %s360
        %p362 = scmp.lt.s32.totalorder %s33, 0
        %s363 = scalar_select %p362, %s33, 0
        %s364 = scalar_lea.vmem %s4, %s363
        %v365 = vld [vmem:[%s311] sm:$0xff]
        %v366 = vld [vmem:[#allocation5] sm:$0xff]
        %v367 = vld [vmem:[#allocation5 + $0x8] sm:$0xff]
        %v368 = vld [vmem:[#allocation5 + $0x10] sm:$0xff]
        %v369 = vld [vmem:[#allocation5 + $0x18] sm:$0xff]
        %v370 = vld [vmem:[#allocation7] sm:$0xff]
        %v371 = vld [vmem:[#allocation7 + $0x8] sm:$0xff]
        %v372 = vld [vmem:[#allocation7 + $0x10] sm:$0xff]
        %v373 = vld [vmem:[#allocation7 + $0x18] sm:$0xff]
        %v374 = vld [vmem:[%s361] sm:$0x1]
        %v376 = vlaneseq
        %v377 = vshrl.u32 %v376, 7
        %v378 = vsub.s32 0, %v377
        %v379 = vrot.slane %v374, %v378
        %vm381 = vcmask 261120
        %v383 = vsel %vm381, %v365, 0
        %385 = vmatprep.subr.mxu0 0.0
        %386 = vmatpush1.msra.mxu0 %v366
        %387 = vmatprep.subr.mxu0 0.0
        %388 = vmatpush1.msra.mxu0 %v367
        %389 = vmatprep.subr.mxu0 0.0
        %390 = vmatpush1.msra.mxu0 %v368
        %391 = vmatprep.subr.mxu0 0.0
        %392 = vmatpush1.msra.mxu0 %v369
        %393 = vmatprep.subr.mxu0 0.0
        %394 = vmatpush1.msra.mxu0 0.0
        %395 = vmatprep.subr.mxu0 0.0
        %396 = vmatpush1.msra.mxu0 0.0
        %397 = vmatprep.subr.mxu0 0.0
        %398 = vmatpush1.msra.mxu0 0.0
        %399 = vmatprep.subr.mxu0 0.0
        %400 = vmatpush1.msra.mxu0 0.0
        %401 = vmatprep.subr.mxu0 0.0
        %402 = vmatpush1.msra.mxu0 0.0
        %403 = vmatprep.subr.mxu0 0.0
        %404 = vmatpush1.msra.mxu0 0.0
        %405 = vmatprep.subr.mxu0 0.0
        %406 = vmatpush1.msra.mxu0 0.0
        %407 = vmatprep.subr.mxu0 0.0
        %408 = vmatpush1.msra.mxu0 0.0
        %409 = vmatprep.subr.mxu0 0.0
        %410 = vmatpush1.msra.mxu0 0.0
        %411 = vmatprep.subr.mxu0 0.0
        %412 = vmatpush1.msra.mxu0 0.0
        %413 = vmatprep.subr.mxu0 0.0
        %414 = vmatpush1.msra.mxu0 0.0
        %415 = vmatprep.subr.mxu0 0.0
        %416 = vmatpush1.msra.mxu0 0.0
        %417 = vmatprep.subr.mxu0 0.0
        %418 = vmatpush1.msra.mxu0 0.0
        %419 = vmatprep.subr.mxu0 0.0
        %420 = vmatpush1.msra.mxu0 0.0
        %421 = vmatprep.subr.mxu0 0.0
        %422 = vmatpush1.msra.mxu0 0.0
        %423 = vmatprep.subr.mxu0 0.0
        %424 = vmatpush1.msra.mxu0 0.0
        %425 = vmatprep.subr.mxu0 0.0
        %426 = vmatpush1.msra.mxu0 0.0
        %427 = vmatprep.subr.mxu0 0.0
        %428 = vmatpush1.msra.mxu0 0.0
        %429 = vmatprep.subr.mxu0 0.0
        %430 = vmatpush1.msra.mxu0 0.0
        %431 = vmatprep.subr.mxu0 0.0
        %432 = vmatpush1.msra.mxu0 0.0
        %433 = vmatprep.subr.mxu0 0.0
        %434 = vmatpush1.msra.mxu0 0.0
        %435 = vmatprep.subr.mxu0 0.0
        %436 = vmatpush1.msra.mxu0 0.0
        %437 = vmatprep.subr.mxu0 0.0
        %438 = vmatpush1.msra.mxu0 0.0
        %439 = vmatprep.subr.mxu0 0.0
        %440 = vmatpush1.msra.mxu0 0.0
        %441 = vmatprep.subr.mxu0 0.0
        %442 = vmatpush1.msra.mxu0 0.0
        %443 = vmatprep.subr.mxu0 0.0
        %444 = vmatpush1.msra.mxu0 0.0
        %445 = vmatprep.subr.mxu0 0.0
        %446 = vmatpush1.msra.mxu0 0.0
        %447 = vmatprep.subr.mxu0 0.0
        %448 = vmatpush1.msra.mxu0 0.0
        %449 = vmatprep.mubr.f32.mxu0 0.0
        %450 = vmatmul.mubr.f32.gmra.mrb[0].mxu0 %v383
        %v451 = vpop.f32.mrb[0].mxu0
        %v452 = vadd.f32 %v379, %v451
        %v453 = vpop.f32.mrb[0].mxu0
        %454 = vdwg.mxu0
        %455 = vst.msk [vmem:[%s351] sm:$0xff] %vm381, %v452
        %v456 = vld [vmem:[%s364] sm:$0x1]
        %v458 = vlaneseq
        %v459 = vshrl.u32 %v458, 7
        %v460 = vsub.s32 0, %v459
        %v461 = vrot.slane %v456, %v460
        %463 = vmatprep.subr.mxu0 0.0
        %464 = vmatpush1.msra.mxu0 %v370
        %465 = vmatprep.subr.mxu0 0.0
        %466 = vmatpush1.msra.mxu0 %v371
        %467 = vmatprep.subr.mxu0 0.0
        %468 = vmatpush1.msra.mxu0 %v372
        %469 = vmatprep.subr.mxu0 0.0
        %470 = vmatpush1.msra.mxu0 %v373
        %471 = vmatprep.subr.mxu0 0.0
        %472 = vmatpush1.msra.mxu0 0.0
        %473 = vmatprep.subr.mxu0 0.0
        %474 = vmatpush1.msra.mxu0 0.0
        %475 = vmatprep.subr.mxu0 0.0
        %476 = vmatpush1.msra.mxu0 0.0
        %477 = vmatprep.subr.mxu0 0.0
        %478 = vmatpush1.msra.mxu0 0.0
        %479 = vmatprep.subr.mxu0 0.0
        %480 = vmatpush1.msra.mxu0 0.0
        %481 = vmatprep.subr.mxu0 0.0
        %482 = vmatpush1.msra.mxu0 0.0
        %483 = vmatprep.subr.mxu0 0.0
        %484 = vmatpush1.msra.mxu0 0.0
        %485 = vmatprep.subr.mxu0 0.0
        %486 = vmatpush1.msra.mxu0 0.0
        %487 = vmatprep.subr.mxu0 0.0
        %488 = vmatpush1.msra.mxu0 0.0
        %489 = vmatprep.subr.mxu0 0.0
        %490 = vmatpush1.msra.mxu0 0.0
        %491 = vmatprep.subr.mxu0 0.0
        %492 = vmatpush1.msra.mxu0 0.0
        %493 = vmatprep.subr.mxu0 0.0
        %494 = vmatpush1.msra.mxu0 0.0
        %495 = vmatprep.subr.mxu0 0.0
        %496 = vmatpush1.msra.mxu0 0.0
        %497 = vmatprep.subr.mxu0 0.0
        %498 = vmatpush1.msra.mxu0 0.0
        %499 = vmatprep.subr.mxu0 0.0
        %500 = vmatpush1.msra.mxu0 0.0
        %501 = vmatprep.subr.mxu0 0.0
        %502 = vmatpush1.msra.mxu0 0.0
        %503 = vmatprep.subr.mxu0 0.0
        %504 = vmatpush1.msra.mxu0 0.0
        %505 = vmatprep.subr.mxu0 0.0
        %506 = vmatpush1.msra.mxu0 0.0
        %507 = vmatprep.subr.mxu0 0.0
        %508 = vmatpush1.msra.mxu0 0.0
        %509 = vmatprep.subr.mxu0 0.0
        %510 = vmatpush1.msra.mxu0 0.0
        %511 = vmatprep.subr.mxu0 0.0
        %512 = vmatpush1.msra.mxu0 0.0
        %513 = vmatprep.subr.mxu0 0.0
        %514 = vmatpush1.msra.mxu0 0.0
        %515 = vmatprep.subr.mxu0 0.0
        %516 = vmatpush1.msra.mxu0 0.0
        %517 = vmatprep.subr.mxu0 0.0
        %518 = vmatpush1.msra.mxu0 0.0
        %519 = vmatprep.subr.mxu0 0.0
        %520 = vmatpush1.msra.mxu0 0.0
        %521 = vmatprep.subr.mxu0 0.0
        %522 = vmatpush1.msra.mxu0 0.0
        %523 = vmatprep.subr.mxu0 0.0
        %524 = vmatpush1.msra.mxu0 0.0
        %525 = vmatprep.subr.mxu0 0.0
        %526 = vmatpush1.msra.mxu0 0.0
        %527 = vmatprep.mubr.f32.mxu0 0.0
        %528 = vmatmul.mubr.f32.gmra.mrb[0].mxu0 %v383
        %v529 = vpop.f32.mrb[0].mxu0
        %v530 = vadd.f32 %v461, %v529
        %v531 = vpop.f32.mrb[0].mxu0
        %532 = vdwg.mxu0
        %533 = vst.msk [vmem:[%s358] sm:$0xff] %vm381, %v530
        %s534 = sand.u32 %s180, 1
        %s535 = scalar_lea.sflag [#allocation4], %s534
        %s536 = sand.u32 %s180, 1
        %s537 = smul.addr %s536, 8
        %s538 = scalar_lea.vmem [#allocation8], %s537
        %s539 = sand.u32 %s208, 1
        %s540 = scalar_lea.sflag [#allocation10], %s539
        %s541 = sand.u32 %s208, 1
        %s542 = smul.addr %s541, 8
        %s543 = scalar_lea.vmem [#allocation9], %s542
        // Predicated region
        $region53: #{tpu_custom_call.1} parent=39 // pred_check
          %p544 = pneg %p190
        $region54: #{tpu_custom_call.1} parent=39 // pred_check_branch
          %546 = sbr.rel (%p544) target = $region56
        $region55: #{tpu_custom_call.1} parent=39 // pred_region
          %s548 = ssub.s32 128, 128
          %549 = vsyncadd %s535, %s548
          %s550 = sadd.s32 %s33, %s32
          %s551 = smul.addr %s550, 128
          %s552 = scalar_lea.hbm %s5, %s551
          %s554 = sshll.u32 %s538, 4
          %s555 = int_to_ptr.vmem [resolvable:$true] %s554
          %557 = dma.vmem_to_hbm [thread:$0]  %s555, 128, %s552, %s535
        $region56: #{tpu_custom_call.1} parent=39 // pred_fallthru
          _
        // Predicated region
        $region57: #{tpu_custom_call.1} parent=39 // pred_check
          %p558 = pneg %p218
        $region58: #{tpu_custom_call.1} parent=39 // pred_check_branch
          %560 = sbr.rel (%p558) target = $region60
        $region59: #{tpu_custom_call.1} parent=39 // pred_region
          %s562 = ssub.s32 128, 128
          %563 = vsyncadd %s540, %s562
          %s564 = sadd.s32 %s33, %s32
          %s565 = smul.addr %s564, 128
          %s566 = scalar_lea.hbm %s6, %s565
          %s568 = sshll.u32 %s543, 4
          %s569 = int_to_ptr.vmem [resolvable:$true] %s568
          %571 = dma.vmem_to_hbm [thread:$0]  %s569, 128, %s566, %s540
        $region60: #{tpu_custom_call.1} parent=39 // pred_fallthru
          _
      $region40: #{tpu_custom_call.1} parent=5 // pred_fallthru
        _
      %p572 = scmp.le.s32.totalorder 2, %s23
      // Predicated region
      $region61: #{tpu_custom_call.1} parent=5 // pred_check
        %p573 = pneg %p572
      $region62: #{tpu_custom_call.1} parent=5 // pred_check_branch
        %575 = sbr.rel (%p573) target = $region64
      $region63: #{tpu_custom_call.1} parent=5 // pred_region
        %s576 = ssub.s32 %s23, 2
        // Predicated region
        $region65: #{tpu_custom_call.1} parent=63 // pred_check
          %p577 = pneg %p196
        $region66: #{tpu_custom_call.1} parent=63 // pred_check_branch
          %579 = sbr.rel (%p577) target = $region68
        $region67: #{tpu_custom_call.1} parent=63 // pred_region
          %s580 = sand.u32 %s181, 1
          %s581 = scalar_lea.sflag [#allocation4], %s580
          %s582 = sand.u32 %s181, 1
          %s583 = smul.addr %s582, 8
          %s584 = scalar_lea.vmem [#allocation8], %s583
          %585 = dma.done %s581, 128
        $region68: #{tpu_custom_call.1} parent=63 // pred_fallthru
          _
        // Predicated region
        $region69: #{tpu_custom_call.1} parent=63 // pred_check
          %p586 = pneg %p224
        $region70: #{tpu_custom_call.1} parent=63 // pred_check_branch
          %588 = sbr.rel (%p586) target = $region72
        $region71: #{tpu_custom_call.1} parent=63 // pred_region
          %s589 = sand.u32 %s209, 1
          %s590 = scalar_lea.sflag [#allocation10], %s589
          %s591 = sand.u32 %s209, 1
          %s592 = smul.addr %s591, 8
          %s593 = scalar_lea.vmem [#allocation9], %s592
          %594 = dma.done %s590, 128
        $region72: #{tpu_custom_call.1} parent=63 // pred_fallthru
          _
      $region64: #{tpu_custom_call.1} parent=5 // pred_fallthru
        _
    $region6: #{tpu_custom_call.1} parent=1 // loop_footer
      %s27 = sadd.s32 1, %s23
    $region7: #{tpu_custom_call.1} parent=1 // loop_footer_branch
      %22 = sbr.rel target = $region3
    $region8: #{tpu_custom_call.1} parent=1 // loop_exit
      _
    %595 = vsyncpa [#allocation3], 1
    %s596 = scalar_lea.sflag [#allocation3], 1
    %597 = vsyncpa %s596, 1
    %598 = vsyncpa [#allocation6], 1
    %599 = vsyncpa [#allocation4], 1
    %s600 = scalar_lea.sflag [#allocation4], 1
    %601 = vsyncpa %s600, 1
    %602 = vsyncpa [#allocation10], 1
    %s603 = scalar_lea.sflag [#allocation10], 1
    %604 = vsyncpa %s603, 1

</llo_original>
